<compile_context>
chip_gen: v7x
topology: tpu7x:2x2x1
jax: 0.10.0
libtpu: 0.0.40
codegen_flags: <defaults>
</compile_context>

<pallas_src>
import math

import jax
import jax.numpy as jnp
from jax.experimental import pallas as pl
from jax.experimental.pallas import tpu as pltpu

# ---------------- config (small shapes implied by the module) ----------------
B = 2                    # batch
S = 8                    # sequence length
NUM_EMBEDDINGS = 50      # vocab size (config['num_embeddings'])
EMBEDDING_DIM = 32       # config['embedding_dim']
HIDDEN_SIZE = 32         # config['hidden_size']  (conv out_channels)
KERNEL_LIST = (2, 3, 4)  # config['kernel_list']
STRIDE = 1               # config['stride']
# TODO(synk): rnn / dan / transformer / use_attention branches and w2v pretrained
#             embeddings are not translated; this implements model_type='conv',
#             use_attention=False.

# ---------------- derived constants ----------------
BS = B * S                                   # flattened (batch, position) rows
KMAX = max(KERNEL_LIST)                      # widest conv window
VPAD = 64                                    # vocab rows padded (>= V, multiple of 8)
KFULL = KMAX * VPAD                          # 256: contraction depth of the single matmul
OUT_DIM = HIDDEN_SIZE * len(KERNEL_LIST)     # 96 real output features
OUT_PAD = 128                                # lane-dense padded output width
OUT_ROWS = 8                                 # sublane-dense padded output rows
TOK_ROWS = BS + 8                            # padded token column (>= BS + KMAX - 1)
NEG = -1e30                                  # additive mask for invalid positions

assert STRIDE == 1, "fused kernel assumes stride == 1 (matches config)"
assert S >= KMAX, "mask-before-max needs >= 1 valid position per kernel size"
assert VPAD >= NUM_EMBEDDINGS and VPAD % 8 == 0
assert KFULL % 128 == 0
assert OUT_PAD >= OUT_DIM
assert OUT_ROWS % B == 0
assert TOK_ROWS >= BS + KMAX - 1


# ---------------- Pallas kernel: fused gather + TextCNN convs + max-pool ----------------
def textcnn_kernel(tok_ref, p_ref, out_ref):
    """tok_ref: (TOK_ROWS, 1) i32   - flattened token ids, zero-padded past BS rows.
    p_ref:   (KFULL + S, OUT_PAD) f32
             rows [0, KFULL)       : fusedW[dk*VPAD + v, c] = sum_e emb[v, e] * W[dk, e, c]
                                     (zero rows for taps dk >= k and for pad vocab / pad cols,
                                      which keeps token wrap/cross-row reads harmless)
             rows [KFULL, KFULL+S) : maskbias[t, c] = bias[c] if position t valid else -1e30
    out_ref: (OUT_ROWS, OUT_PAD) f32 - rows [0, B) hold the pooled features.
    """
    toks = tok_ref[...]                                              # (TOK_ROWS, 1)

    # 1) block-diagonal one-hot: onehot[r, dk*VPAD + v] = (tokens[r + dk] == v)
    col = jax.lax.broadcasted_iota(jnp.int32, (BS, KFULL), 1)
    v_id = col & (VPAD - 1)                                          # vocab id per column
    sel = jnp.broadcast_to(toks[0:BS, :], (BS, KFULL))
    for dk in range(1, KMAX):
        shifted = jnp.broadcast_to(toks[dk:dk + BS, :], (BS, KFULL))
        sel = jnp.where(col >= dk * VPAD, shifted, sel)              # lane block dk
    onehot = (sel == v_id).astype(jnp.float32)                       # (BS, KFULL)

    # 2) single MXU matmul: embedding gather + every conv branch at once
    pre = jnp.dot(onehot, p_ref[pl.ds(0, KFULL), :],
                  preferred_element_type=jnp.float32)                # (BS, OUT_PAD)

    # 3) precomputed additive epilogue (+bias on valid positions, -1e30 on invalid),
    #    then MaxPool1d over the sequence. Bias is per-channel => exact under the max.
    maskbias = p_ref[pl.ds(KFULL, S), :]                             # (S, OUT_PAD)
    pre = pre.reshape(B, S, OUT_PAD) + maskbias[None, :, :]
    pooled = jnp.max(pre, axis=1)                                    # (B, OUT_PAD)

    # 4) dense (8, 128) store; wrapper slices to (B, OUT_DIM)
    out_ref[...] = jnp.tile(pooled, (OUT_ROWS // B, 1))


# ---------------- one-time parameter fusion (init-time, NOT per call) ----------------
def pack_params(emb_weight, conv_params):
    """emb_weight: (V, E) f32. conv_params: list of (w (k,E,H), b (1,H)) per kernel size.
    Returns the single (KFULL + S, OUT_PAD) f32 ref consumed by the kernel."""
    emb_pad = jnp.zeros((VPAD, EMBEDDING_DIM), jnp.float32)
    emb_pad = emb_pad.at[:NUM_EMBEDDINGS].set(emb_weight.astype(jnp.float32))

    packed = jnp.zeros((KFULL + S, OUT_PAD), jnp.float32)
    pos = jnp.arange(S)[:, None]                                     # output position t
    for j, (k, (w, b)) in enumerate(zip(KERNEL_LIST, conv_params)):
        c0, c1 = j * HIDDEN_SIZE, (j + 1) * HIDDEN_SIZE
        # fusedW: pre-multiply the padded embedding into each tap's weight slice.
        # taps dk >= k stay zero rows -> wrap/cross-row tokens can never leak into output.
        for dk in range(k):
            blk = jnp.dot(emb_pad, w[dk].astype(jnp.float32),
                          precision=jax.lax.Precision.HIGHEST)       # (VPAD, H)
            packed = packed.at[dk * VPAD:(dk + 1) * VPAD, c0:c1].set(blk)
        # additive epilogue rows: +bias for valid positions t <= S-k, -1e30 otherwise.
        mb = jnp.where(pos <= S - k, jnp.broadcast_to(b, (S, HIDDEN_SIZE)), NEG)
        packed = packed.at[KFULL:KFULL + S, c0:c1].set(mb)
    return packed


# ---------------- per-call wrapper (gridless, everything VMEM-resident) ----------------
@jax.jit
def textcnn_pallas(tokens, packed):
    tok = tokens.reshape(-1).astype(jnp.int32)
    tok = jnp.pad(tok, (0, TOK_ROWS - BS)).reshape(TOK_ROWS, 1)      # only per-call prep
    vmem = pl.BlockSpec(memory_space=pltpu.MemorySpace.VMEM)
    pooled = pl.pallas_call(
        textcnn_kernel,
        out_shape=jax.ShapeDtypeStruct((OUT_ROWS, OUT_PAD), jnp.float32),
        in_specs=[vmem, vmem],
        out_specs=vmem,
    )(tok, packed)
    return pooled[:B, :OUT_DIM]


def sentence_encoder_forward(tokens, packed):
    # generate_attention_mask: True where token == 0 (computed, unused on conv branch)
    mask = ~(tokens >= 1)
    del mask
    feats = textcnn_pallas(tokens, packed)                           # (B, H*len(K))
    return feats, None


# ---------------- parameter init (deterministic, matches module shapes) ----------------
def xavier_uniform(key, shape, fan_in, fan_out, dtype=jnp.float32):
    bound = math.sqrt(6.0 / (fan_in + fan_out))
    return jax.random.uniform(key, shape, dtype, -bound, bound)


def init_params(key):
    keys = jax.random.split(key, 1 + 2 * len(KERNEL_LIST))
    # nn.Embedding(V, E, padding_idx=0) followed by xavier_uniform_ (overwrites row 0)
    emb = xavier_uniform(keys[0], (NUM_EMBEDDINGS, EMBEDDING_DIM),
                         fan_in=EMBEDDING_DIM, fan_out=NUM_EMBEDDINGS)
    conv_params = []
    for i, k in enumerate(KERNEL_LIST):
        wk, bk = keys[1 + 2 * i], keys[2 + 2 * i]
        fan_in = 1 * k * EMBEDDING_DIM
        fan_out = HIDDEN_SIZE * k * EMBEDDING_DIM
        # PyTorch layout (H, 1, k, E), xavier_uniform_
        w_torch = xavier_uniform(wk, (HIDDEN_SIZE, 1, k, EMBEDDING_DIM), fan_in, fan_out)
        w = jnp.transpose(w_torch[:, 0, :, :], (1, 2, 0))            # -> (k, E, H)
        bbound = 1.0 / math.sqrt(fan_in)
        b = jax.random.uniform(bk, (1, HIDDEN_SIZE), jnp.float32, -bbound, bbound)
        conv_params.append((w, b))
    return emb, conv_params


# ---------------- pure-JAX reference (NCHW conv, as in PyTorch) ----------------
def reference_forward(tokens, emb_weight, conv_params):
    x_emb = jnp.take(emb_weight, tokens, axis=0).astype(jnp.float32)  # (B, S, E)
    x_nchw = x_emb[:, None, :, :]                                     # (B, 1, S, E)
    feats = []
    for (w, b), k in zip(conv_params, KERNEL_LIST):
        w_oihw = jnp.transpose(w, (2, 0, 1))[:, None, :, :]           # (H, 1, k, E)
        out = jax.lax.conv_general_dilated(
            x_nchw, w_oihw, window_strides=(STRIDE, STRIDE), padding="VALID",
            dimension_numbers=("NCHW", "OIHW", "NCHW"),
            precision=jax.lax.Precision.HIGHEST)                      # (B, H, T, 1)
        out = out[..., 0] + b[0][None, :, None]                       # (B, H, T)
        feats.append(jnp.max(out, axis=-1))                           # (B, H)
    return jnp.concatenate(feats, axis=-1)


if __name__ == "__main__":
    key = jax.random.PRNGKey(0)
    k_tok, k_par = jax.random.split(key)

    # token ids in [0, V), with explicit padding (0) at the tail
    tokens = jax.random.randint(k_tok, (B, S), 1, NUM_EMBEDDINGS, dtype=jnp.int32)
    tokens = tokens.at[0, -2:].set(0).at[1, -3:].set(0)

    emb_weight, conv_params = init_params(k_par)
    packed = pack_params(emb_weight, conv_params)     # fused once at init, reused per call

    feats, attn = sentence_encoder_forward(tokens, packed)
    feats = jax.block_until_ready(feats)

    ref = reference_forward(tokens, emb_weight, conv_params)
    assert feats.shape == (B, OUT_DIM)
    assert attn is None
    assert bool(jnp.allclose(feats, ref, atol=1e-4, rtol=1e-4)), "mismatch vs reference"

    print("KERNEL_OK")
</pallas_src>

<mosaic_0001>
module attributes {stable_mosaic.version = 11 : i64} {
  func.func @textcnn_kernel(%arg0: memref<24x1xi32, #tpu.memory_space<vmem>>, %arg1: memref<264x128xf32, #tpu.memory_space<vmem>>, %arg2: memref<8x128xf32, #tpu.memory_space<vmem>>) attributes {dimension_semantics = [], scalar_prefetch = 0 : i64, scratch_operands = 0 : i64, tpu.core_type = #tpu.core_type<tc>} {
    %c0 = arith.constant 0 : index
    %c0_0 = arith.constant 0 : index
    %0 = vector.load %arg0[%c0, %c0_0] : memref<24x1xi32, #tpu.memory_space<vmem>>, vector<24x1xi32>
    %1 = tpu.iota {dimensions = array<i32: 1>} : vector<16x256xi32>
    %c63_i32 = arith.constant 63 : i32
    %2 = vector.broadcast %c63_i32 : i32 to vector<16x256xi32>
    %3 = arith.andi %1, %2 : vector<16x256xi32>
    %4 = vector.extract_strided_slice %0 {offsets = [0, 0], sizes = [16, 1], strides = [1, 1]} : vector<24x1xi32> to vector<16x1xi32>
    %5 = vector.shape_cast %4 : vector<16x1xi32> to vector<16x1xi32>
    %6 = vector.broadcast %5 : vector<16x1xi32> to vector<16x256xi32>
    %7 = vector.extract_strided_slice %0 {offsets = [1, 0], sizes = [16, 1], strides = [1, 1]} : vector<24x1xi32> to vector<16x1xi32>
    %8 = vector.shape_cast %7 : vector<16x1xi32> to vector<16x1xi32>
    %9 = vector.broadcast %8 : vector<16x1xi32> to vector<16x256xi32>
    %c64_i32 = arith.constant 64 : i32
    %10 = vector.broadcast %c64_i32 : i32 to vector<16x256xi32>
    %11 = arith.cmpi sge, %1, %10 : vector<16x256xi32>
    %12 = arith.select %11, %9, %6 : vector<16x256xi1>, vector<16x256xi32>
    %13 = vector.extract_strided_slice %0 {offsets = [2, 0], sizes = [16, 1], strides = [1, 1]} : vector<24x1xi32> to vector<16x1xi32>
    %14 = vector.shape_cast %13 : vector<16x1xi32> to vector<16x1xi32>
    %15 = vector.broadcast %14 : vector<16x1xi32> to vector<16x256xi32>
    %c128_i32 = arith.constant 128 : i32
    %16 = vector.broadcast %c128_i32 : i32 to vector<16x256xi32>
    %17 = arith.cmpi sge, %1, %16 : vector<16x256xi32>
    %18 = arith.select %17, %15, %12 : vector<16x256xi1>, vector<16x256xi32>
    %19 = vector.extract_strided_slice %0 {offsets = [3, 0], sizes = [16, 1], strides = [1, 1]} : vector<24x1xi32> to vector<16x1xi32>
    %20 = vector.shape_cast %19 : vector<16x1xi32> to vector<16x1xi32>
    %21 = vector.broadcast %20 : vector<16x1xi32> to vector<16x256xi32>
    %c192_i32 = arith.constant 192 : i32
    %22 = vector.broadcast %c192_i32 : i32 to vector<16x256xi32>
    %23 = arith.cmpi sge, %1, %22 : vector<16x256xi32>
    %24 = arith.select %23, %21, %18 : vector<16x256xi1>, vector<16x256xi32>
    %25 = arith.cmpi eq, %24, %3 : vector<16x256xi32>
    %26 = arith.extui %25 : vector<16x256xi1> to vector<16x256xi32>
    %27 = arith.sitofp %26 : vector<16x256xi32> to vector<16x256xf32>
    %c0_1 = arith.constant 0 : index
    %c0_2 = arith.constant 0 : index
    %28 = vector.load %arg1[%c0_1, %c0_2] : memref<264x128xf32, #tpu.memory_space<vmem>>, vector<256x128xf32>
    %cst = arith.constant dense<0.000000e+00> : vector<16x128xf32>
    %29 = tpu.matmul %27, %28, %cst {dimension_numbers = #tpu.dot_dimension_numbers<[1], [0], [0], [1], [0, 0, 1, 1], [], []>} : vector<16x256xf32>, vector<256x128xf32>, vector<16x128xf32> -> vector<16x128xf32>
    %c256 = arith.constant 256 : index
    %c0_3 = arith.constant 0 : index
    %30 = vector.load %arg1[%c256, %c0_3] : memref<264x128xf32, #tpu.memory_space<vmem>>, vector<8x128xf32>
    %31 = vector.shape_cast %29 : vector<16x128xf32> to vector<2x8x128xf32>
    %32 = vector.shape_cast %30 : vector<8x128xf32> to vector<1x8x128xf32>
    %33 = vector.broadcast %32 : vector<1x8x128xf32> to vector<2x8x128xf32>
    %34 = arith.addf %31, %33 : vector<2x8x128xf32>
    %cst_4 = arith.constant dense<0xFF800000> : vector<2x128xf32>
    %35 = vector.multi_reduction <maximumf>, %34, %cst_4 [1] : vector<2x8x128xf32> to vector<2x128xf32>
    %36 = tpu.concatenate %35, %35, %35, %35 in 0 : vector<2x128xf32>, vector<2x128xf32>, vector<2x128xf32>, vector<2x128xf32> -> vector<8x128xf32>
    %c0_5 = arith.constant 0 : index
    %c0_6 = arith.constant 0 : index
    %37 = vector.load %arg2[%c0_5, %c0_6] : memref<8x128xf32, #tpu.memory_space<vmem>>, vector<8x128xf32>
    tpu.vector_store %arg2[%c0_5, %c0_6], %36 {strides = array<i32>} : memref<8x128xf32, #tpu.memory_space<vmem>>, vector<8x128xf32>,
    return
  }
}

</mosaic_0001>

<llo_original>
// kernel: textcnn_pallas.1
$region0: #{textcnn_pallas.1}
  #allocation0 [shape = 'u32[]', space=smem, size = 0x4, offset = 0x4, fixed_abs, tag = 'smem constant byte address 0x4 - core index']
  #allocation1 [shape = 'u32[144,128]{1,0:T(1,128)}', space=vmem, size = 0x12000, scoped, tag = 'internal scratch']
  %s0 = inlined_call_operand.vmem [shape: s32[24,1], index: 0, kind: input, shape index: {}]
  %s1 = inlined_call_operand.hbm [shape: f32[264,128], index: 1, kind: input, shape index: {}]
  %s2 = inlined_call_operand.vmem [shape: f32[8,128], index: 2, kind: output, shape index: {}]
  %s3 = sld [smem:[#allocation0]]
  $region22: #{textcnn_pallas.1} parent=0
    _
  %s5 = ssub.s32 1, %s3
  %s6 = scalar_select 0, %s5, %s3
  $region1: #{textcnn_pallas.1} parent=0
    #allocation2 [shape = 'u8[135168]{0}', space=vmem, size = 0x21000, scoped, tag = 'input window, operand 1, single buffered']
    #allocation3 [shape = 's32[1]{0}', space=sflag, size = 0x4, scoped, tag = 'scoped memory for textcnn_pallas.1']
    %7 = vsyncpa [#allocation3], 0
    // Predicated region
    $region2: #{textcnn_pallas.1} parent=1 // pred_check
      _
    $region3: #{textcnn_pallas.1} parent=1 // pred_check_branch
      %9 = sbr.rel (0) target = $region5
    $region4: #{textcnn_pallas.1} parent=1 // pred_region
      _
    $region5: #{textcnn_pallas.1} parent=1 // pred_fallthru
      _
    // Predicated region
    $region6: #{textcnn_pallas.1} parent=1 // pred_check
      _
    $region7: #{textcnn_pallas.1} parent=1 // pred_check_branch
      %11 = sbr.rel (0) target = $region9
    $region8: #{textcnn_pallas.1} parent=1 // pred_region
      %s13 = ssub.s32 4224, 4224
      %14 = vsyncadd [#allocation3], %s13
      %s15 = sshll.u32 [#allocation2], 4
      %s16 = int_to_ptr.vmem [resolvable:$true] %s15
      %21 = dma.hbm_to_vmem [thread:$0]  %s1, 4224, %s16, [#allocation3], 128, 128, 8
    $region9: #{textcnn_pallas.1} parent=1 // pred_fallthru
      _
    // Predicated region
    $region10: #{textcnn_pallas.1} parent=1 // pred_check
      _
    $region11: #{textcnn_pallas.1} parent=1 // pred_check_branch
      %23 = sbr.rel (0) target = $region13
    $region12: #{textcnn_pallas.1} parent=1 // pred_region
      %24 = dma.done [#allocation3], 4224
    $region13: #{textcnn_pallas.1} parent=1 // pred_fallthru
      _
    %v25 = vld [vmem:[%s0] sm:$0xff]
    %v26 = vld [vmem:[%s0 + $0x8] sm:$0xff]
    %v27 = vld [vmem:[%s0 + $0x10] sm:$0xff]
    %v28 = vlaneseq
    %v29 = vand.u32 %v28, 127
    %v30 = vadd.s32 %v29, 128
    %v31 = vand.u32 %v29, 63
    %v32 = vand.u32 %v30, 63
    %33 = vset.pattern.permute.xlu0 0
    %34 = vperm.xlu0 %33, %v25
    %v35 = vpop.permute.xlu0 %34
    %36 = vset.pattern.permute.xlu0 0
    %37 = vperm.xlu0 %36, %v26
    %v38 = vpop.permute.xlu0 %37
    %39 = vset.pattern.permute.xlu0 0
    %40 = vperm.xlu0 %39, %v27
    %v41 = vpop.permute.xlu0 %40
    %vm42 = vcmp.ge.s32.totalorder %v29, 64
    %vm43 = vcmp.ge.s32.totalorder %v30, 64
    %vm44 = vcmask 1040384
    %v45 = vrot.slane %v35, 7
    %v46 = vrot.slane %v38, 7
    %v47 = vsel %vm44, %v45, %v46
    %v48 = vsel %vm42, %v35, %v45
    %v49 = vsel %vm43, %v35, %v45
    %v50 = vsel %vm42, %v38, %v47
    %v51 = vsel %vm43, %v38, %v47
    %v52 = vsel %vm42, %v41, %v46
    %v53 = vsel %vm43, %v41, %v46
    %vm54 = vcmp.ge.s32.totalorder %v29, 128
    %vm55 = vcmp.ge.s32.totalorder %v30, 128
    %v56 = vrot.slane %v48, 7
    %v57 = vrot.slane %v49, 7
    %v58 = vrot.slane %v50, 7
    %v59 = vsel %vm44, %v56, %v58
    %v60 = vrot.slane %v51, 7
    %v61 = vsel %vm44, %v57, %v60
    %v62 = vrot.slane %v52, 7
    %v63 = vsel %vm44, %v58, %v62
    %v64 = vrot.slane %v53, 7
    %v65 = vsel %vm44, %v60, %v64
    %v66 = vsel %vm54, %v35, %v56
    %v67 = vsel %vm55, %v35, %v57
    %v68 = vsel %vm54, %v38, %v59
    %v69 = vsel %vm55, %v38, %v61
    %v70 = vsel %vm54, %v41, %v63
    %v71 = vsel %vm55, %v41, %v65
    %vm72 = vcmp.ge.s32.totalorder %v29, 192
    %vm73 = vcmp.ge.s32.totalorder %v30, 192
    %v74 = vrot.slane %v66, 7
    %v75 = vrot.slane %v67, 7
    %v76 = vrot.slane %v68, 7
    %v77 = vsel %vm44, %v74, %v76
    %v78 = vrot.slane %v69, 7
    %v79 = vsel %vm44, %v75, %v78
    %v80 = vrot.slane %v70, 7
    %v81 = vsel %vm44, %v76, %v80
    %v82 = vrot.slane %v71, 7
    %v83 = vsel %vm44, %v78, %v82
    %v84 = vsel %vm72, %v35, %v74
    %v85 = vsel %vm73, %v35, %v75
    %v86 = vsel %vm72, %v38, %v77
    %v87 = vsel %vm73, %v38, %v79
    %v88 = vsel %vm72, %v41, %v81
    %v89 = vsel %vm73, %v41, %v83
    %vm90 = vcmp.eq.s32.totalorder %v84, %v31
    %vm91 = vcmp.eq.s32.totalorder %v85, %v32
    %vm92 = vcmp.eq.s32.totalorder %v86, %v31
    %vm93 = vcmp.eq.s32.totalorder %v87, %v32
    %vm94 = vcmp.eq.s32.totalorder %v88, %v31
    %vm95 = vcmp.eq.s32.totalorder %v89, %v32
    %v96 = vsel %vm90, 1, 0
    %v97 = vsel %vm91, 1, 0
    %v98 = vsel %vm92, 1, 0
    %v99 = vsel %vm93, 1, 0
    %v100 = vsel %vm94, 1, 0
    %v101 = vsel %vm95, 1, 0
    %v102 = vcvt.s32.f32 %v96
    %v103 = vcvt.s32.f32 %v97
    %v104 = vcvt.s32.f32 %v98
    %v105 = vcvt.s32.f32 %v99
    %v106 = vcvt.s32.f32 %v100
    %v107 = vcvt.s32.f32 %v101
    %v108 = vld [vmem:[#allocation2] sm:$0xff]
    %v109 = vld [vmem:[#allocation2 + $0x8] sm:$0xff]
    %v110 = vld [vmem:[#allocation2 + $0x10] sm:$0xff]
    %v111 = vld [vmem:[#allocation2 + $0x18] sm:$0xff]
    %v112 = vld [vmem:[#allocation2 + $0x20] sm:$0xff]
    %v113 = vld [vmem:[#allocation2 + $0x28] sm:$0xff]
    %v114 = vld [vmem:[#allocation2 + $0x30] sm:$0xff]
    %v115 = vld [vmem:[#allocation2 + $0x38] sm:$0xff]
    %v116 = vld [vmem:[#allocation2 + $0x40] sm:$0xff]
    %v117 = vld [vmem:[#allocation2 + $0x48] sm:$0xff]
    %v118 = vld [vmem:[#allocation2 + $0x50] sm:$0xff]
    %v119 = vld [vmem:[#allocation2 + $0x58] sm:$0xff]
    %v120 = vld [vmem:[#allocation2 + $0x60] sm:$0xff]
    %v121 = vld [vmem:[#allocation2 + $0x68] sm:$0xff]
    %v122 = vld [vmem:[#allocation2 + $0x70] sm:$0xff]
    %v123 = vld [vmem:[#allocation2 + $0x78] sm:$0xff]
    %v124 = vld [vmem:[#allocation2 + $0x80] sm:$0xff]
    %v125 = vld [vmem:[#allocation2 + $0x88] sm:$0xff]
    %v126 = vld [vmem:[#allocation2 + $0x90] sm:$0xff]
    %v127 = vld [vmem:[#allocation2 + $0x98] sm:$0xff]
    %v128 = vld [vmem:[#allocation2 + $0xa0] sm:$0xff]
    %v129 = vld [vmem:[#allocation2 + $0xa8] sm:$0xff]
    %v130 = vld [vmem:[#allocation2 + $0xb0] sm:$0xff]
    %v131 = vld [vmem:[#allocation2 + $0xb8] sm:$0xff]
    %v132 = vld [vmem:[#allocation2 + $0xc0] sm:$0xff]
    %v133 = vld [vmem:[#allocation2 + $0xc8] sm:$0xff]
    %v134 = vld [vmem:[#allocation2 + $0xd0] sm:$0xff]
    %v135 = vld [vmem:[#allocation2 + $0xd8] sm:$0xff]
    %v136 = vld [vmem:[#allocation2 + $0xe0] sm:$0xff]
    %v137 = vld [vmem:[#allocation2 + $0xe8] sm:$0xff]
    %v138 = vld [vmem:[#allocation2 + $0xf0] sm:$0xff]
    %v139 = vld [vmem:[#allocation2 + $0xf8] sm:$0xff]
    %vm146 = vcmask 1044480
    %v147 = vrot.slane %v102, 3
    %v148 = vrot.slane %v104, 3
    %v149 = vsel %vm146, %v147, %v148
    %v150 = vrot.slane %v103, 3
    %v151 = vrot.slane %v105, 3
    %v152 = vsel %vm146, %v150, %v151
    %v153 = vrot.slane %v106, 3
    %v154 = vsel %vm146, %v148, %v153
    %v155 = vrot.slane %v107, 3
    %v156 = vsel %vm146, %v151, %v155
    %161 = vmatprep.subr.mxu0 0.0
    %162 = vmatpush1.msra.mxu0 %v108
    %163 = vmatprep.subr.mxu0 0.0
    %164 = vmatpush1.msra.mxu0 %v109
    %165 = vmatprep.subr.mxu0 0.0
    %166 = vmatpush1.msra.mxu0 %v110
    %167 = vmatprep.subr.mxu0 0.0
    %168 = vmatpush1.msra.mxu0 %v111
    %169 = vmatprep.subr.mxu0 0.0
    %170 = vmatpush1.msra.mxu0 %v112
    %171 = vmatprep.subr.mxu0 0.0
    %172 = vmatpush1.msra.mxu0 %v113
    %173 = vmatprep.subr.mxu0 0.0
    %174 = vmatpush1.msra.mxu0 %v114
    %175 = vmatprep.subr.mxu0 0.0
    %176 = vmatpush1.msra.mxu0 %v115
    %177 = vmatprep.subr.mxu0 0.0
    %178 = vmatpush1.msra.mxu0 %v116
    %179 = vmatprep.subr.mxu0 0.0
    %180 = vmatpush1.msra.mxu0 %v117
    %181 = vmatprep.subr.mxu0 0.0
    %182 = vmatpush1.msra.mxu0 %v118
    %183 = vmatprep.subr.mxu0 0.0
    %184 = vmatpush1.msra.mxu0 %v119
    %185 = vmatprep.subr.mxu0 0.0
    %186 = vmatpush1.msra.mxu0 %v120
    %187 = vmatprep.subr.mxu0 0.0
    %188 = vmatpush1.msra.mxu0 %v121
    %189 = vmatprep.subr.mxu0 0.0
    %190 = vmatpush1.msra.mxu0 %v122
    %191 = vmatprep.subr.mxu0 0.0
    %192 = vmatpush1.msra.mxu0 %v123
    %193 = vmatprep.subr.mxu0 0.0
    %194 = vmatpush1.msra.mxu0 %v124
    %195 = vmatprep.subr.mxu0 0.0
    %196 = vmatpush1.msra.mxu0 %v125
    %197 = vmatprep.subr.mxu0 0.0
    %198 = vmatpush1.msra.mxu0 %v126
    %199 = vmatprep.subr.mxu0 0.0
    %200 = vmatpush1.msra.mxu0 %v127
    %201 = vmatprep.subr.mxu0 0.0
    %202 = vmatpush1.msra.mxu0 %v128
    %203 = vmatprep.subr.mxu0 0.0
    %204 = vmatpush1.msra.mxu0 %v129
    %205 = vmatprep.subr.mxu0 0.0
    %206 = vmatpush1.msra.mxu0 %v130
    %207 = vmatprep.subr.mxu0 0.0
    %208 = vmatpush1.msra.mxu0 %v131
    %209 = vmatprep.subr.mxu0 0.0
    %210 = vmatpush1.msra.mxu0 %v132
    %211 = vmatprep.subr.mxu0 0.0
    %212 = vmatpush1.msra.mxu0 %v133
    %213 = vmatprep.subr.mxu0 0.0
    %214 = vmatpush1.msra.mxu0 %v134
    %215 = vmatprep.subr.mxu0 0.0
    %216 = vmatpush1.msra.mxu0 %v135
    %217 = vmatprep.subr.mxu0 0.0
    %218 = vmatpush1.msra.mxu0 %v136
    %219 = vmatprep.subr.mxu0 0.0
    %220 = vmatpush1.msra.mxu0 %v137
    %221 = vmatprep.subr.mxu0 0.0
    %222 = vmatpush1.msra.mxu0 %v138
    %223 = vmatprep.subr.mxu0 0.0
    %224 = vmatpush1.msra.mxu0 %v139
    %225 = vmatprep.mubr.f32.mxu0 %v152
    %226 = vmatmul.mubr.f32.gmra.mrb[0].mxu0 %v149
    %v227 = vpop.f32.mrb[0].mxu0
    %v228 = vadd.f32 0.0, %v227
    %v229 = vpop.f32.mrb[0].mxu0
    %230 = vmatprep.mubr.f32.mxu0 %v156
    %231 = vmatmul.mubr.f32.gmra.mrb[0].mxu0 %v154
    %v232 = vpop.f32.mrb[0].mxu0
    %v233 = vadd.f32 0.0, %v232
    %v234 = vpop.f32.mrb[0].mxu0
    %235 = vdwg.mxu0
    %v236 = vld [vmem:[#allocation2 + $0x100] sm:$0xff]
    %v237 = vadd.f32 %v228, %v236
    %v238 = vadd.f32 %v233, %v236
    %v239 = vrot.slane %v237, 4
    %v240 = vmax.f32 %v237, %v239
    %v241 = vrot.slane %v240, 2
    %v242 = vmax.f32 %v240, %v241
    %v243 = vrot.slane %v242, 1
    %v244 = vmax.f32 %v242, %v243
    %v245 = vrot.slane %v238, 4
    %v246 = vmax.f32 %v238, %v245
    %v247 = vrot.slane %v246, 2
    %v248 = vmax.f32 %v246, %v247
    %v249 = vrot.slane %v248, 1
    %v250 = vmax.f32 %v248, %v249
    %vm253 = vcmask 1041409
    %v254 = vsel %vm253, %v250, %v244
    %vm256 = vcmask 1043459
    %v257 = vsel %vm256, %v250, %v244
    %vm259 = vcmask 1045509
    %v260 = vsel %vm259, %v250, %v244
    %vm262 = vcmask 1047559
    %v263 = vsel %vm262, %v250, %v244
    %vm265 = vcmask 1041408
    %v266 = vsel %vm265, %v254, %v257
    %vm267 = vcmask 1043456
    %v268 = vsel %vm267, %v266, %v260
    %vm269 = vcmask 1045504
    %v270 = vsel %vm269, %v268, %v263
    %271 = vst [vmem:[%s2] sm:$0xff] %v270
    // Predicated region
    $region14: #{textcnn_pallas.1} parent=1 // pred_check
      _
    $region15: #{textcnn_pallas.1} parent=1 // pred_check_branch
      %273 = sbr.rel (0) target = $region17
    $region16: #{textcnn_pallas.1} parent=1 // pred_region
      _
    $region17: #{textcnn_pallas.1} parent=1 // pred_fallthru
      _
    // Predicated region
    $region18: #{textcnn_pallas.1} parent=1 // pred_check
      _
    $region19: #{textcnn_pallas.1} parent=1 // pred_check_branch
      %275 = sbr.rel (0) target = $region21
    $region20: #{textcnn_pallas.1} parent=1 // pred_region
      _
    $region21: #{textcnn_pallas.1} parent=1 // pred_fallthru
      _
    %276 = vsyncpa [#allocation3], 1

</llo_original>
